<compile_context>
chip_gen: v5e
topology: v5e:2x2
jax: 0.10.0
libtpu: 0.0.40
codegen_flags: <defaults>
</compile_context>

<pallas_src>
import jax
import jax.numpy as jnp
from jax.experimental import pallas as pl
from jax.experimental.pallas import tpu as pltpu

LEAKY_SLOPE = 0.01   # F.leaky_relu default negative slope
LN_EPS = 1e-5        # nn.LayerNorm default eps
LANE = 128           # vreg lane width


def _round_up(x: int, m: int) -> int:
    return (x + m - 1) // m * m


def _physical_vmem_bytes() -> int:
    try:
        return int(pltpu.get_tpu_info().vmem_capacity_bytes)
    except Exception:
        return 64 * 1024 * 1024   # conservative fallback: v7x per-TensorCore VMEM


# ----------------------------------------------------------------------------
# Fused Pallas kernel: (Linear -> LayerNorm|Identity -> LeakyReLU)* -> Linear
# ----------------------------------------------------------------------------
def _make_fused_mlp_kernel(n_layers: int, norm: str, hidden_true_feats):
    """hidden_true_feats[i] = un-padded feature count of hidden layer i (for LN)."""

    def kernel(x_ref, *refs):
        o_ref = refs[-1]
        wb = refs[:-1]                       # w0, b0, w1, b1, ..., wL, bL
        compute_dtype = x_ref.dtype          # MXU operand dtype (bf16 by default)

        h = x_ref[...]                       # (TM, in_f) in compute dtype
        for li in range(n_layers):
            w = wb[2 * li][...]              # (k_pad, n_pad) in compute dtype
            b = wb[2 * li + 1][...]          # (1, n_pad) already f32
            # f32 accumulation on the MXU; operands stay in their storage dtype.
            y = jnp.dot(h, w, preferred_element_type=jnp.float32) + b

            if li < n_layers - 1:
                if norm == "layer":
                    # Single-pass LayerNorm stats over the TRUE feature count
                    # (padded lanes are exactly zero before LN, so the sums are
                    # unaffected); var clamped >= 0 against cancellation.
                    inv_n = 1.0 / float(hidden_true_feats[li])
                    mean = jnp.sum(y, axis=-1, keepdims=True) * inv_n
                    mean_sq = jnp.sum(y * y, axis=-1, keepdims=True) * inv_n
                    var = jnp.maximum(mean_sq - mean * mean, 0.0)
                    y = (y - mean) * jax.lax.rsqrt(var + LN_EPS)
                # norm == "none": identity
                y = jnp.maximum(y, LEAKY_SLOPE * y)          # leaky_relu (mul+max)
                h = y.astype(compute_dtype)                  # back to MXU dtype
            else:
                # Final Linear: no norm, no activation. Lane-dense padded store.
                o_ref[...] = y.astype(o_ref.dtype)

    return kernel


# ----------------------------------------------------------------------------
# Wrapper: padding, batch tiling, BlockSpecs, VMEM budgeting, cost estimate
# ----------------------------------------------------------------------------
def mlp_forward(params, x, norm: str = "layer", *,
                max_batch_tile: int = 512,
                compute_dtype=jnp.bfloat16):
    """Fused MLP forward. params = [(W_i [in,out], b_i [out]), ...]."""
    norm = norm.lower()
    if norm == "batch":
        # TODO(synk): 'batch' norm (BatchNorm1d with running stats) not implemented.
        raise NotImplementedError("norm='batch' is not implemented in the Pallas kernel")
    if norm not in ("layer", "none"):
        raise ValueError(f"norm must be 'layer', 'batch' or 'none', got {norm}")

    orig_dtype = x.dtype
    batch, in_f = x.shape
    n_layers = len(params)
    out_f = params[-1][0].shape[1]
    out_pad = _round_up(out_f, LANE)

    comp_bytes = jnp.dtype(compute_dtype).itemsize
    out_bytes = jnp.dtype(orig_dtype).itemsize

    # ---- Pad every layer's feature dims to a lane multiple (zero cols / rows);
    #      the next layer's zero rows nullify any garbage in padded lanes. ----
    padded = []
    hidden_true = []
    prev_pad = in_f
    for li, (w, b) in enumerate(params):
        kin, kout = w.shape
        kout_pad = out_pad if li == n_layers - 1 else _round_up(kout, LANE)
        w_p = jnp.pad(w, ((0, prev_pad - kin), (0, kout_pad - kout))).astype(compute_dtype)
        b_p = jnp.pad(b, (0, kout_pad - kout)).astype(jnp.float32).reshape(1, kout_pad)
        padded.append((w_p, b_p))
        if li < n_layers - 1:
            hidden_true.append(kout)
        prev_pad = kout_pad

    # ---- Batch tiling: multiple of 8; >= 2 grid steps when batch allows so the
    #      "parallel" grid axis can shard across v7x's two TensorCores. ----
    tm_cap = max(8, _round_up(max_batch_tile, 8))
    batch8 = _round_up(batch, 8)
    if batch8 <= 8:
        tm = batch8
    elif batch8 <= tm_cap:
        tm = _round_up(pl.cdiv(batch8, 2), 8)   # split into (at least) two tiles
    else:
        tm = tm_cap
    batch_pad = _round_up(batch, tm)
    grid = (batch_pad // tm,)

    x = x.astype(compute_dtype)
    if batch_pad != batch:
        x = jnp.pad(x, ((0, batch_pad - batch), (0, 0)))

    # ---- BlockSpecs: x / out double-buffered (default), weights/biases
    #      single-buffered (constant block across the grid). ----
    in_specs = [pl.BlockSpec((tm, in_f), lambda i: (i, 0))]
    # TODO(synk): if profiling on v5e shows the x-tile DMA exposed, bump this to
    # pipeline_mode=pl.Buffered(3).
    flat_args = [x]
    flops = 0
    weight_bytes = 0
    max_feat = in_f
    for (w, b) in padded:
        kin, kout = w.shape
        max_feat = max(max_feat, kout)
        in_specs.append(pl.BlockSpec((kin, kout), lambda i: (0, 0),
                                     pipeline_mode=pl.Buffered(1)))
        in_specs.append(pl.BlockSpec((1, kout), lambda i: (0, 0),
                                     pipeline_mode=pl.Buffered(1)))
        flat_args.extend([w, b])
        flops += 2 * batch_pad * kin * kout
        weight_bytes += w.size * comp_bytes + b.size * 4   # single-buffered

    out_specs = pl.BlockSpec((tm, out_pad), lambda i: (i, 0))

    # ---- Advisory cost estimate for the XLA scheduler. ----
    bytes_accessed = (batch_pad * in_f * comp_bytes
                      + batch_pad * out_pad * out_bytes
                      + weight_bytes)
    transcendentals = batch_pad * (n_layers - 1) if norm == "layer" else 0
    cost = pl.CostEstimate(flops=flops, transcendentals=transcendentals,
                           bytes_accessed=bytes_accessed)

    # ---- VMEM budget: 2x x-tile + 2x out-tile, 1x resident weights/biases,
    #      live f32 intermediates (y + LN temporaries) + h in compute dtype. ----
    vmem_needed = (
        2 * tm * in_f * comp_bytes
        + 2 * tm * out_pad * out_bytes
        + weight_bytes
        + 3 * tm * max_feat * 4
        + tm * max_feat * comp_bytes
    )
    physical_vmem = _physical_vmem_bytes()
    vmem_cap = int(0.78 * physical_vmem)       # ~50 MiB on v7x, ~100 MiB on v5e/v6e
    vmem_limit = min(max(int(1.25 * vmem_needed), 32 * 1024 * 1024), vmem_cap)
    # TODO(synk): if vmem_needed exceeds vmem_cap (weights don't fit resident),
    # add an output-feature ("arbitrary") grid axis to stream the largest
    # layer's weights instead of shrinking tm or unfusing.

    compiler_params = pltpu.CompilerParams(
        dimension_semantics=("parallel",),
        vmem_limit_bytes=vmem_limit,
    )

    kernel = _make_fused_mlp_kernel(n_layers, norm, hidden_true)
    out = pl.pallas_call(
        kernel,
        out_shape=jax.ShapeDtypeStruct((batch_pad, out_pad), orig_dtype),
        grid=grid,
        in_specs=in_specs,
        out_specs=out_specs,
        compiler_params=compiler_params,
        cost_estimate=cost,
    )(*flat_args)

    return out[:batch, :out_f]


# ----------------------------------------------------------------------------
# Parameter init (PyTorch nn.Linear default: U(-1/sqrt(fan_in), 1/sqrt(fan_in)))
# ----------------------------------------------------------------------------
def init_mlp_params(key, sizes, dtype=jnp.float32):
    params = []
    for in_size, out_size in zip(sizes[:-1], sizes[1:]):
        key, kw, kb = jax.random.split(key, 3)
        bound = 1.0 / jnp.sqrt(jnp.float32(in_size))
        w = jax.random.uniform(kw, (in_size, out_size), dtype, minval=-bound, maxval=bound)
        b = jax.random.uniform(kb, (out_size,), dtype, minval=-bound, maxval=bound)
        params.append((w, b))
    return params


# ----------------------------------------------------------------------------
# Plain-JAX reference (mirrors MLP.forward), full f32
# ----------------------------------------------------------------------------
def mlp_ref(params, x, norm="layer"):
    for w, b in params[:-1]:
        y = jnp.dot(x, w, preferred_element_type=jnp.float32) + b
        if norm == "layer":
            mean = jnp.mean(y, axis=-1, keepdims=True)
            var = jnp.mean((y - mean) ** 2, axis=-1, keepdims=True)
            y = (y - mean) * jax.lax.rsqrt(var + LN_EPS)
        x = jnp.where(y >= 0, y, LEAKY_SLOPE * y).astype(x.dtype)
    w, b = params[-1]
    return (jnp.dot(x, w, preferred_element_type=jnp.float32) + b).astype(x.dtype)


if __name__ == "__main__":
    key = jax.random.PRNGKey(0)
    sizes = [32, 64, 64, 16]   # input -> hidden -> hidden -> output
    batch = 8

    kparams, kx = jax.random.split(key)
    params = init_mlp_params(kparams, sizes)
    x = jax.random.normal(kx, (batch, sizes[0]), jnp.float32)

    f32_ref_layer = mlp_ref(params, x, norm="layer")
    f32_ref_none = mlp_ref(params, x, norm="none")

    # Default path: bf16 MXU operands, f32 accumulation + f32 epilogue.
    out = jax.block_until_ready(mlp_forward(params, x, norm="layer"))
    assert out.shape == (batch, sizes[-1])
    assert out.dtype == x.dtype
    assert jnp.allclose(out, f32_ref_layer, atol=5e-2, rtol=5e-2), \
        "mismatch vs reference (layer, bf16 operands)"

    out_n = jax.block_until_ready(mlp_forward(params, x, norm="none"))
    assert jnp.allclose(out_n, f32_ref_none, atol=5e-2, rtol=5e-2), \
        "mismatch vs reference (none, bf16 operands)"

    # Full-f32 operand path: tight-tolerance correctness check of the fused kernel.
    out32 = jax.block_until_ready(
        mlp_forward(params, x, norm="layer", compute_dtype=jnp.float32))
    assert jnp.allclose(out32, f32_ref_layer, atol=3e-4, rtol=3e-4), \
        "mismatch vs reference (layer, f32 operands)"

    print("KERNEL_OK")
</pallas_src>

<mosaic_0001>
module attributes {stable_mosaic.version = 11 : i64} {
  func.func @kernel(%arg0: i32, %arg1: memref<8x32xbf16, #tpu.memory_space<vmem>>, %arg2: memref<32x128xbf16, #tpu.memory_space<vmem>>, %arg3: memref<1x128xf32, #tpu.memory_space<vmem>>, %arg4: memref<128x128xbf16, #tpu.memory_space<vmem>>, %arg5: memref<1x128xf32, #tpu.memory_space<vmem>>, %arg6: memref<128x128xbf16, #tpu.memory_space<vmem>>, %arg7: memref<1x128xf32, #tpu.memory_space<vmem>>, %arg8: memref<8x128xf32, #tpu.memory_space<vmem>>) attributes {dimension_semantics = [#tpu.dimension_semantics<parallel>], iteration_bounds = array<i64: 1>, scalar_prefetch = 0 : i64, scratch_operands = 0 : i64, tpu.core_type = #tpu.core_type<tc>, window_params = [{transform_indices = @transform_0, window_bounds = array<i64: 8, 32>}, {pipeline_mode = #tpu.pipeline_mode<synchronous>, transform_indices = @transform_1, window_bounds = array<i64: 32, 128>}, {pipeline_mode = #tpu.pipeline_mode<synchronous>, transform_indices = @transform_2, window_bounds = array<i64: 1, 128>}, {pipeline_mode = #tpu.pipeline_mode<synchronous>, transform_indices = @transform_3, window_bounds = array<i64: 128, 128>}, {pipeline_mode = #tpu.pipeline_mode<synchronous>, transform_indices = @transform_4, window_bounds = array<i64: 1, 128>}, {pipeline_mode = #tpu.pipeline_mode<synchronous>, transform_indices = @transform_5, window_bounds = array<i64: 128, 128>}, {pipeline_mode = #tpu.pipeline_mode<synchronous>, transform_indices = @transform_6, window_bounds = array<i64: 1, 128>}, {transform_indices = @transform_7, window_bounds = array<i64: 8, 128>}]} {
    %c0 = arith.constant 0 : index
    %c0_0 = arith.constant 0 : index
    %0 = vector.load %arg1[%c0, %c0_0] : memref<8x32xbf16, #tpu.memory_space<vmem>>, vector<8x32xbf16>
    %c0_1 = arith.constant 0 : index
    %c0_2 = arith.constant 0 : index
    %1 = vector.load %arg2[%c0_1, %c0_2] : memref<32x128xbf16, #tpu.memory_space<vmem>>, vector<32x128xbf16>
    %c0_3 = arith.constant 0 : index
    %c0_4 = arith.constant 0 : index
    %2 = vector.load %arg3[%c0_3, %c0_4] : memref<1x128xf32, #tpu.memory_space<vmem>>, vector<1x128xf32>
    %cst = arith.constant dense<0.000000e+00> : vector<8x128xf32>
    %3 = tpu.matmul %0, %1, %cst {dimension_numbers = #tpu.dot_dimension_numbers<[1], [0], [0], [1], [0, 0, 1, 1], [], []>} : vector<8x32xbf16>, vector<32x128xbf16>, vector<8x128xf32> -> vector<8x128xf32>
    %4 = vector.broadcast %2 : vector<1x128xf32> to vector<8x128xf32>
    %5 = arith.addf %3, %4 : vector<8x128xf32>
    %cst_5 = arith.constant dense<0.000000e+00> : vector<8xf32>
    %6 = vector.multi_reduction <add>, %5, %cst_5 [1] : vector<8x128xf32> to vector<8xf32>
    %7 = vector.shape_cast %6 : vector<8xf32> to vector<8x1xf32>
    %cst_6 = arith.constant 1.562500e-02 : f32
    %8 = vector.broadcast %cst_6 : f32 to vector<8x1xf32>
    %9 = arith.mulf %7, %8 : vector<8x1xf32>
    %10 = arith.mulf %5, %5 : vector<8x128xf32>
    %cst_7 = arith.constant dense<0.000000e+00> : vector<8xf32>
    %11 = vector.multi_reduction <add>, %10, %cst_7 [1] : vector<8x128xf32> to vector<8xf32>
    %12 = vector.shape_cast %11 : vector<8xf32> to vector<8x1xf32>
    %cst_8 = arith.constant 1.562500e-02 : f32
    %13 = vector.broadcast %cst_8 : f32 to vector<8x1xf32>
    %14 = arith.mulf %12, %13 : vector<8x1xf32>
    %15 = arith.mulf %9, %9 : vector<8x1xf32>
    %16 = arith.subf %14, %15 : vector<8x1xf32>
    %cst_9 = arith.constant 0.000000e+00 : f32
    %17 = vector.broadcast %cst_9 : f32 to vector<8x1xf32>
    %18 = arith.maximumf %16, %17 : vector<8x1xf32>
    %19 = vector.broadcast %9 : vector<8x1xf32> to vector<8x128xf32>
    %20 = arith.subf %5, %19 : vector<8x128xf32>
    %cst_10 = arith.constant 9.99999974E-6 : f32
    %21 = vector.broadcast %cst_10 : f32 to vector<8x1xf32>
    %22 = arith.addf %18, %21 : vector<8x1xf32>
    %23 = math.rsqrt %22 : vector<8x1xf32>
    %24 = vector.broadcast %23 : vector<8x1xf32> to vector<8x128xf32>
    %25 = arith.mulf %20, %24 : vector<8x128xf32>
    %cst_11 = arith.constant 0.00999999977 : f32
    %26 = vector.broadcast %cst_11 : f32 to vector<8x128xf32>
    %27 = arith.mulf %26, %25 : vector<8x128xf32>
    %28 = arith.maximumf %25, %27 : vector<8x128xf32>
    %29 = arith.truncf %28 : vector<8x128xf32> to vector<8x128xbf16>
    %c0_12 = arith.constant 0 : index
    %c0_13 = arith.constant 0 : index
    %30 = vector.load %arg4[%c0_12, %c0_13] : memref<128x128xbf16, #tpu.memory_space<vmem>>, vector<128x128xbf16>
    %c0_14 = arith.constant 0 : index
    %c0_15 = arith.constant 0 : index
    %31 = vector.load %arg5[%c0_14, %c0_15] : memref<1x128xf32, #tpu.memory_space<vmem>>, vector<1x128xf32>
    %cst_16 = arith.constant dense<0.000000e+00> : vector<8x128xf32>
    %32 = tpu.matmul %29, %30, %cst_16 {dimension_numbers = #tpu.dot_dimension_numbers<[1], [0], [0], [1], [0, 0, 1, 1], [], []>} : vector<8x128xbf16>, vector<128x128xbf16>, vector<8x128xf32> -> vector<8x128xf32>
    %33 = vector.broadcast %31 : vector<1x128xf32> to vector<8x128xf32>
    %34 = arith.addf %32, %33 : vector<8x128xf32>
    %cst_17 = arith.constant dense<0.000000e+00> : vector<8xf32>
    %35 = vector.multi_reduction <add>, %34, %cst_17 [1] : vector<8x128xf32> to vector<8xf32>
    %36 = vector.shape_cast %35 : vector<8xf32> to vector<8x1xf32>
    %cst_18 = arith.constant 1.562500e-02 : f32
    %37 = vector.broadcast %cst_18 : f32 to vector<8x1xf32>
    %38 = arith.mulf %36, %37 : vector<8x1xf32>
    %39 = arith.mulf %34, %34 : vector<8x128xf32>
    %cst_19 = arith.constant dense<0.000000e+00> : vector<8xf32>
    %40 = vector.multi_reduction <add>, %39, %cst_19 [1] : vector<8x128xf32> to vector<8xf32>
    %41 = vector.shape_cast %40 : vector<8xf32> to vector<8x1xf32>
    %cst_20 = arith.constant 1.562500e-02 : f32
    %42 = vector.broadcast %cst_20 : f32 to vector<8x1xf32>
    %43 = arith.mulf %41, %42 : vector<8x1xf32>
    %44 = arith.mulf %38, %38 : vector<8x1xf32>
    %45 = arith.subf %43, %44 : vector<8x1xf32>
    %cst_21 = arith.constant 0.000000e+00 : f32
    %46 = vector.broadcast %cst_21 : f32 to vector<8x1xf32>
    %47 = arith.maximumf %45, %46 : vector<8x1xf32>
    %48 = vector.broadcast %38 : vector<8x1xf32> to vector<8x128xf32>
    %49 = arith.subf %34, %48 : vector<8x128xf32>
    %cst_22 = arith.constant 9.99999974E-6 : f32
    %50 = vector.broadcast %cst_22 : f32 to vector<8x1xf32>
    %51 = arith.addf %47, %50 : vector<8x1xf32>
    %52 = math.rsqrt %51 : vector<8x1xf32>
    %53 = vector.broadcast %52 : vector<8x1xf32> to vector<8x128xf32>
    %54 = arith.mulf %49, %53 : vector<8x128xf32>
    %cst_23 = arith.constant 0.00999999977 : f32
    %55 = vector.broadcast %cst_23 : f32 to vector<8x128xf32>
    %56 = arith.mulf %55, %54 : vector<8x128xf32>
    %57 = arith.maximumf %54, %56 : vector<8x128xf32>
    %58 = arith.truncf %57 : vector<8x128xf32> to vector<8x128xbf16>
    %c0_24 = arith.constant 0 : index
    %c0_25 = arith.constant 0 : index
    %59 = vector.load %arg6[%c0_24, %c0_25] : memref<128x128xbf16, #tpu.memory_space<vmem>>, vector<128x128xbf16>
    %c0_26 = arith.constant 0 : index
    %c0_27 = arith.constant 0 : index
    %60 = vector.load %arg7[%c0_26, %c0_27] : memref<1x128xf32, #tpu.memory_space<vmem>>, vector<1x128xf32>
    %cst_28 = arith.constant dense<0.000000e+00> : vector<8x128xf32>
    %61 = tpu.matmul %58, %59, %cst_28 {dimension_numbers = #tpu.dot_dimension_numbers<[1], [0], [0], [1], [0, 0, 1, 1], [], []>} : vector<8x128xbf16>, vector<128x128xbf16>, vector<8x128xf32> -> vector<8x128xf32>
    %62 = vector.broadcast %60 : vector<1x128xf32> to vector<8x128xf32>
    %63 = arith.addf %61, %62 : vector<8x128xf32>
    %c0_29 = arith.constant 0 : index
    %c0_30 = arith.constant 0 : index
    %64 = vector.load %arg8[%c0_29, %c0_30] : memref<8x128xf32, #tpu.memory_space<vmem>>, vector<8x128xf32>
    tpu.vector_store %arg8[%c0_29, %c0_30], %63 {strides = array<i32>} : memref<8x128xf32, #tpu.memory_space<vmem>>, vector<8x128xf32>,
    return
  }
  func.func @transform_0(%arg0: i32) -> (i32, i32) {
    %c0_i32 = arith.constant 0 : i32
    %c0_i32_0 = arith.constant 0 : i32
    return %arg0, %c0_i32 : i32, i32
  }
  func.func @transform_1(%arg0: i32) -> (i32, i32) {
    %c0_i32 = arith.constant 0 : i32
    %c0_i32_0 = arith.constant 0 : i32
    %c0_i32_1 = arith.constant 0 : i32
    return %c0_i32, %c0_i32_0 : i32, i32
  }
  func.func @transform_2(%arg0: i32) -> (i32, i32) {
    %c0_i32 = arith.constant 0 : i32
    %c0_i32_0 = arith.constant 0 : i32
    %c0_i32_1 = arith.constant 0 : i32
    return %c0_i32, %c0_i32_0 : i32, i32
  }
  func.func @transform_3(%arg0: i32) -> (i32, i32) {
    %c0_i32 = arith.constant 0 : i32
    %c0_i32_0 = arith.constant 0 : i32
    %c0_i32_1 = arith.constant 0 : i32
    return %c0_i32, %c0_i32_0 : i32, i32
  }
  func.func @transform_4(%arg0: i32) -> (i32, i32) {
    %c0_i32 = arith.constant 0 : i32
    %c0_i32_0 = arith.constant 0 : i32
    %c0_i32_1 = arith.constant 0 : i32
    return %c0_i32, %c0_i32_0 : i32, i32
  }
  func.func @transform_5(%arg0: i32) -> (i32, i32) {
    %c0_i32 = arith.constant 0 : i32
    %c0_i32_0 = arith.constant 0 : i32
    %c0_i32_1 = arith.constant 0 : i32
    return %c0_i32, %c0_i32_0 : i32, i32
  }
  func.func @transform_6(%arg0: i32) -> (i32, i32) {
    %c0_i32 = arith.constant 0 : i32
    %c0_i32_0 = arith.constant 0 : i32
    %c0_i32_1 = arith.constant 0 : i32
    return %c0_i32, %c0_i32_0 : i32, i32
  }
  func.func @transform_7(%arg0: i32) -> (i32, i32) {
    %c0_i32 = arith.constant 0 : i32
    %c0_i32_0 = arith.constant 0 : i32
    return %arg0, %c0_i32 : i32, i32
  }
}

</mosaic_0001>

<llo_original>
// kernel: tpu_custom_call.1
$region0: #{tpu_custom_call.1}
  #allocation0 [shape = 'u32[]', space=smem, size = 0x4, offset = 0x4, fixed_abs, tag = 'smem constant byte address 0x4 - core index']
  #allocation1 [shape = 'u32[72,128]{1,0:T(1,128)}', space=vmem, size = 0x9000, scoped, tag = 'internal scratch']
  %s0 = inlined_call_operand.hbm [shape: bf16[8,32], index: 0, kind: input, shape index: {}]
  %s1 = inlined_call_operand.hbm [shape: bf16[32,128], index: 1, kind: input, shape index: {}]
  %s2 = inlined_call_operand.vmem [shape: f32[1,128], index: 2, kind: input, shape index: {}]
  %s3 = inlined_call_operand.hbm [shape: bf16[128,128], index: 3, kind: input, shape index: {}]
  %s4 = inlined_call_operand.vmem [shape: f32[1,128], index: 4, kind: input, shape index: {}]
  %s5 = inlined_call_operand.hbm [shape: bf16[128,128], index: 5, kind: input, shape index: {}]
  %s6 = inlined_call_operand.vmem [shape: f32[1,128], index: 6, kind: input, shape index: {}]
  %s7 = inlined_call_operand.hbm [shape: f32[8,128], index: 7, kind: output, shape index: {}]
  %s8 = sld [smem:[#allocation0]]
  $region54: #{tpu_custom_call.1} parent=0
    _
  %s10 = ssub.s32 1, %s8
  %s11 = scalar_select 0, %s10, %s8
  $region1: #{tpu_custom_call.1} parent=0
    #allocation2 [shape = 'u8[2048]{0}', space=vmem, size = 0x800, scoped, tag = 'input window, operand 0, single buffered']
    #allocation3 [shape = 's32[1]{0}', space=sflag, size = 0x4, scoped, tag = 'scoped memory for tpu_custom_call.1']
    #allocation4 [shape = 's32[1]{0}', space=sflag, size = 0x4, scoped, tag = 'scoped memory for tpu_custom_call.1']
    #allocation5 [shape = 'u8[8192]{0}', space=vmem, size = 0x2000, scoped, tag = 'input window, operand 1, single buffered']
    #allocation6 [shape = 's32[1]{0}', space=sflag, size = 0x4, scoped, tag = 'scoped memory for tpu_custom_call.1']
    #allocation7 [shape = 'u8[32768]{0}', space=vmem, size = 0x8000, scoped, tag = 'input window, operand 3, single buffered']
    #allocation8 [shape = 'u8[32768]{0}', space=vmem, size = 0x8000, scoped, tag = 'input window, operand 5, single buffered']
    #allocation9 [shape = 's32[1]{0}', space=sflag, size = 0x4, scoped, tag = 'scoped memory for tpu_custom_call.1']
    #allocation10 [shape = 'u8[4096]{0}', space=vmem, size = 0x1000, scoped, tag = 'output window, operand 0, single buffered']
    %12 = vsyncpa [#allocation3], 0
    %13 = vsyncpa [#allocation6], 0
    %14 = vsyncpa [#allocation9], 0
    %15 = vsyncpa [#allocation4], 0
    // Predicated region
    $region2: #{tpu_custom_call.1} parent=1 // pred_check
      _
    $region3: #{tpu_custom_call.1} parent=1 // pred_check_branch
      %17 = sbr.rel (0) target = $region5
    $region4: #{tpu_custom_call.1} parent=1 // pred_region
      %19 = vsyncadd [#allocation3], 0
      %s21 = sshll.u32 %s0, 4
      %s22 = int_to_ptr.hbm [resolvable:$true] %s21
      %s23 = sshll.u32 [#allocation2], 4
      %s24 = int_to_ptr.vmem [resolvable:$true] %s23
      %26 = dma.hbm_to_vmem [thread:$0]  %s22, 64, %s24, [#allocation3]
    $region5: #{tpu_custom_call.1} parent=1 // pred_fallthru
      _
    // Predicated region
    $region6: #{tpu_custom_call.1} parent=1 // pred_check
      _
    $region7: #{tpu_custom_call.1} parent=1 // pred_check_branch
      %28 = sbr.rel (0) target = $region9
    $region8: #{tpu_custom_call.1} parent=1 // pred_region
      %30 = vsyncadd [#allocation6], 0
      %s31 = sshll.u32 %s1, 4
      %s32 = int_to_ptr.hbm [resolvable:$true] %s31
      %s33 = sshll.u32 [#allocation5], 4
      %s34 = int_to_ptr.vmem [resolvable:$true] %s33
      %39 = dma.hbm_to_vmem [thread:$0]  %s32, 256, %s34, [#allocation6], 64, 64, 4
    $region9: #{tpu_custom_call.1} parent=1 // pred_fallthru
      _
    // Predicated region
    $region10: #{tpu_custom_call.1} parent=1 // pred_check
      _
    $region11: #{tpu_custom_call.1} parent=1 // pred_check_branch
      %41 = sbr.rel (0) target = $region13
    $region12: #{tpu_custom_call.1} parent=1 // pred_region
      _
    $region13: #{tpu_custom_call.1} parent=1 // pred_fallthru
      _
    // Predicated region
    $region14: #{tpu_custom_call.1} parent=1 // pred_check
      _
    $region15: #{tpu_custom_call.1} parent=1 // pred_check_branch
      %43 = sbr.rel (0) target = $region17
    $region16: #{tpu_custom_call.1} parent=1 // pred_region
      %45 = vsyncadd [#allocation6], 0
      %s46 = sshll.u32 %s3, 4
      %s47 = int_to_ptr.hbm [resolvable:$true] %s46
      %s48 = sshll.u32 [#allocation7], 4
      %s49 = int_to_ptr.vmem [resolvable:$true] %s48
      %54 = dma.hbm_to_vmem [thread:$0]  %s47, 1024, %s49, [#allocation6], 64, 64, 4
    $region17: #{tpu_custom_call.1} parent=1 // pred_fallthru
      _
    // Predicated region
    $region18: #{tpu_custom_call.1} parent=1 // pred_check
      _
    $region19: #{tpu_custom_call.1} parent=1 // pred_check_branch
      %56 = sbr.rel (0) target = $region21
    $region20: #{tpu_custom_call.1} parent=1 // pred_region
      _
    $region21: #{tpu_custom_call.1} parent=1 // pred_fallthru
      _
    // Predicated region
    $region22: #{tpu_custom_call.1} parent=1 // pred_check
      _
    $region23: #{tpu_custom_call.1} parent=1 // pred_check_branch
      %58 = sbr.rel (0) target = $region25
    $region24: #{tpu_custom_call.1} parent=1 // pred_region
      %60 = vsyncadd [#allocation9], 0
      %s61 = sshll.u32 %s5, 4
      %s62 = int_to_ptr.hbm [resolvable:$true] %s61
      %s63 = sshll.u32 [#allocation8], 4
      %s64 = int_to_ptr.vmem [resolvable:$true] %s63
      %69 = dma.hbm_to_vmem [thread:$0]  %s62, 1024, %s64, [#allocation9], 64, 64, 4
    $region25: #{tpu_custom_call.1} parent=1 // pred_fallthru
      _
    // Predicated region
    $region26: #{tpu_custom_call.1} parent=1 // pred_check
      _
    $region27: #{tpu_custom_call.1} parent=1 // pred_check_branch
      %71 = sbr.rel (0) target = $region29
    $region28: #{tpu_custom_call.1} parent=1 // pred_region
      _
    $region29: #{tpu_custom_call.1} parent=1 // pred_fallthru
      _
    // Predicated region
    $region30: #{tpu_custom_call.1} parent=1 // pred_check
      _
    $region31: #{tpu_custom_call.1} parent=1 // pred_check_branch
      %73 = sbr.rel (0) target = $region33
    $region32: #{tpu_custom_call.1} parent=1 // pred_region
      %75 = dma.done [#allocation3], 64
    $region33: #{tpu_custom_call.1} parent=1 // pred_fallthru
      _
    // Predicated region
    $region34: #{tpu_custom_call.1} parent=1 // pred_check
      _
    $region35: #{tpu_custom_call.1} parent=1 // pred_check_branch
      %77 = sbr.rel (0) target = $region37
    $region36: #{tpu_custom_call.1} parent=1 // pred_region
      %79 = dma.done [#allocation6], 256
    $region37: #{tpu_custom_call.1} parent=1 // pred_fallthru
      _
    // Predicated region
    $region38: #{tpu_custom_call.1} parent=1 // pred_check
      _
    $region39: #{tpu_custom_call.1} parent=1 // pred_check_branch
      %81 = sbr.rel (0) target = $region41
    $region40: #{tpu_custom_call.1} parent=1 // pred_region
      %83 = dma.done [#allocation6], 1024
    $region41: #{tpu_custom_call.1} parent=1 // pred_fallthru
      _
    // Predicated region
    $region42: #{tpu_custom_call.1} parent=1 // pred_check
      _
    $region43: #{tpu_custom_call.1} parent=1 // pred_check_branch
      %85 = sbr.rel (0) target = $region45
    $region44: #{tpu_custom_call.1} parent=1 // pred_region
      %87 = dma.done [#allocation9], 1024
    $region45: #{tpu_custom_call.1} parent=1 // pred_fallthru
      _
    %v89 = vld [vmem:[#allocation2] sm:$0xf]
    %v90 = vld [vmem:[#allocation5] sm:$0xf]
    %v91 = vld [vmem:[#allocation5 + $0x4] sm:$0xf]
    %v92 = vld [vmem:[#allocation5 + $0x8] sm:$0xf]
    %v93 = vld [vmem:[#allocation5 + $0xc] sm:$0xf]
    %v94 = vld [vmem:[%s2] sm:$0x1]
    %v96 = vperm.slane %v94, 0
    %v102 = vunpack.c.l.b16 %v90
    %v103 = vunpack.c.l.b16 %v91
    %v104 = vunpack.c.l.b16 %v92
    %v105 = vunpack.c.l.b16 %v93
    %v106 = vpack.c.b16 %v103, %v102
    %v107 = vpack.c.b16 %v105, %v104
    %vm110 = vcmask 261120
    %v112 = vsel %vm110, %v89, 0
    %114 = vmatpush.bf16.msra.mxu0 0
    %115 = vmatpush.bf16.msra.mxu0 0
    %116 = vmatpush.bf16.msra.mxu0 0
    %117 = vmatpush.bf16.msra.mxu0 0
    %118 = vmatpush.bf16.msra.mxu0 0
    %119 = vmatpush.bf16.msra.mxu0 0
    %120 = vmatpush.bf16.msra.mxu0 %v107
    %121 = vmatpush.bf16.msra.mxu0 %v106
    %122 = vmatmul.bf16.gmra.mxu0 %v112
    %v123 = vpop.f32.mrf.mxu0
    %v124 = vadd.f32 %v96, %v123
    %v125 = vpop.f32.mrf.mxu0
    %126 = vdwg.mxu0
    %127 = vadd.xlane.f32.xlu0 %v124
    %v128 = vpop.xlane.xlu0 %127
    %v129 = vmul.f32 %v128, 0.015625
    %v130 = vmul.f32 %v124, %v124
    %131 = vadd.xlane.f32.xlu0 %v130
    %v132 = vpop.xlane.xlu0 %131
    %v133 = vmul.f32 %v132, 0.015625
    %v134 = vmul.f32 %v129, %v129
    %v135 = vsub.f32 %v133, %v134
    %v136 = vmax.f32 %v135, 0.0
    %v137 = vsub.f32 %v124, %v129
    %v138 = vadd.f32 %v136, 1e-05
    %v139 = vrsqrt.pop %v138
    %v140 = vmul.f32 %v139, %v138
    %v141 = vmul.f32 %v140, %v139
    %v142 = vmul.f32 0.5, %v141
    %v143 = vsub.f32 1.5, %v142
    %v144 = vmul.f32 %v139, %v143
    %vm145 = vweird.f32 %v138
    %vm146 = vweird.f32 %v139
    %vm147 = vmor %vm145, %vm146
    %v148 = vsel %vm147, %v139, %v144
    %v149 = vmul.f32 %v137, %v148
    %v150 = vmul.f32 %v149, 0.01
    %v151 = vmax.f32 %v149, %v150
    %v152 = vpack.c.bf16 %v151, %v151
    %v153 = vld [vmem:[#allocation7] sm:$0xf]
    %v154 = vld [vmem:[#allocation7 + $0x4] sm:$0xf]
    %v155 = vld [vmem:[#allocation7 + $0x8] sm:$0xf]
    %v156 = vld [vmem:[#allocation7 + $0xc] sm:$0xf]
    %v157 = vld [vmem:[#allocation7 + $0x10] sm:$0xf]
    %v158 = vld [vmem:[#allocation7 + $0x14] sm:$0xf]
    %v159 = vld [vmem:[#allocation7 + $0x18] sm:$0xf]
    %v160 = vld [vmem:[#allocation7 + $0x1c] sm:$0xf]
    %v161 = vld [vmem:[#allocation7 + $0x20] sm:$0xf]
    %v162 = vld [vmem:[#allocation7 + $0x24] sm:$0xf]
    %v163 = vld [vmem:[#allocation7 + $0x28] sm:$0xf]
    %v164 = vld [vmem:[#allocation7 + $0x2c] sm:$0xf]
    %v165 = vld [vmem:[#allocation7 + $0x30] sm:$0xf]
    %v166 = vld [vmem:[#allocation7 + $0x34] sm:$0xf]
    %v167 = vld [vmem:[#allocation7 + $0x38] sm:$0xf]
    %v168 = vld [vmem:[#allocation7 + $0x3c] sm:$0xf]
    %v169 = vld [vmem:[%s4] sm:$0x1]
    %v171 = vperm.slane %v169, 0
    %v189 = vunpack.c.l.b16 %v153
    %v190 = vunpack.c.l.b16 %v154
    %v191 = vunpack.c.l.b16 %v155
    %v192 = vunpack.c.l.b16 %v156
    %v193 = vunpack.c.l.b16 %v157
    %v194 = vunpack.c.l.b16 %v158
    %v195 = vunpack.c.l.b16 %v159
    %v196 = vunpack.c.l.b16 %v160
    %v197 = vunpack.c.l.b16 %v161
    %v198 = vunpack.c.l.b16 %v162
    %v199 = vunpack.c.l.b16 %v163
    %v200 = vunpack.c.l.b16 %v164
    %v201 = vunpack.c.l.b16 %v165
    %v202 = vunpack.c.l.b16 %v166
    %v203 = vunpack.c.l.b16 %v167
    %v204 = vunpack.c.l.b16 %v168
    %v205 = vpack.c.b16 %v190, %v189
    %v206 = vpack.c.b16 %v192, %v191
    %v207 = vpack.c.b16 %v194, %v193
    %v208 = vpack.c.b16 %v196, %v195
    %v209 = vpack.c.b16 %v198, %v197
    %v210 = vpack.c.b16 %v200, %v199
    %v211 = vpack.c.b16 %v202, %v201
    %v212 = vpack.c.b16 %v204, %v203
    %221 = vmatpush.bf16.msra.mxu0 %v212
    %222 = vmatpush.bf16.msra.mxu0 %v211
    %223 = vmatpush.bf16.msra.mxu0 %v210
    %224 = vmatpush.bf16.msra.mxu0 %v209
    %225 = vmatpush.bf16.msra.mxu0 %v208
    %226 = vmatpush.bf16.msra.mxu0 %v207
    %227 = vmatpush.bf16.msra.mxu0 %v206
    %228 = vmatpush.bf16.msra.mxu0 %v205
    %229 = vmatmul.bf16.gmra.mxu0 %v152
    %v230 = vpop.f32.mrf.mxu0
    %v231 = vadd.f32 %v171, %v230
    %v232 = vpop.f32.mrf.mxu0
    %233 = vdwg.mxu0
    %234 = vadd.xlane.f32.xlu0 %v231
    %v235 = vpop.xlane.xlu0 %234
    %v236 = vmul.f32 %v235, 0.015625
    %v237 = vmul.f32 %v231, %v231
    %238 = vadd.xlane.f32.xlu0 %v237
    %v239 = vpop.xlane.xlu0 %238
    %v240 = vmul.f32 %v239, 0.015625
    %v241 = vmul.f32 %v236, %v236
    %v242 = vsub.f32 %v240, %v241
    %v243 = vmax.f32 %v242, 0.0
    %v244 = vsub.f32 %v231, %v236
    %v245 = vadd.f32 %v243, 1e-05
    %v246 = vrsqrt.pop %v245
    %v247 = vmul.f32 %v246, %v245
    %v248 = vmul.f32 %v247, %v246
    %v249 = vmul.f32 0.5, %v248
    %v250 = vsub.f32 1.5, %v249
    %v251 = vmul.f32 %v246, %v250
    %vm252 = vweird.f32 %v245
    %vm253 = vweird.f32 %v246
    %vm254 = vmor %vm252, %vm253
    %v255 = vsel %vm254, %v246, %v251
    %v256 = vmul.f32 %v244, %v255
    %v257 = vmul.f32 %v256, 0.01
    %v258 = vmax.f32 %v256, %v257
    %v259 = vpack.c.bf16 %v258, %v258
    %v260 = vld [vmem:[#allocation8] sm:$0xf]
    %v261 = vld [vmem:[#allocation8 + $0x4] sm:$0xf]
    %v262 = vld [vmem:[#allocation8 + $0x8] sm:$0xf]
    %v263 = vld [vmem:[#allocation8 + $0xc] sm:$0xf]
    %v264 = vld [vmem:[#allocation8 + $0x10] sm:$0xf]
    %v265 = vld [vmem:[#allocation8 + $0x14] sm:$0xf]
    %v266 = vld [vmem:[#allocation8 + $0x18] sm:$0xf]
    %v267 = vld [vmem:[#allocation8 + $0x1c] sm:$0xf]
    %v268 = vld [vmem:[#allocation8 + $0x20] sm:$0xf]
    %v269 = vld [vmem:[#allocation8 + $0x24] sm:$0xf]
    %v270 = vld [vmem:[#allocation8 + $0x28] sm:$0xf]
    %v271 = vld [vmem:[#allocation8 + $0x2c] sm:$0xf]
    %v272 = vld [vmem:[#allocation8 + $0x30] sm:$0xf]
    %v273 = vld [vmem:[#allocation8 + $0x34] sm:$0xf]
    %v274 = vld [vmem:[#allocation8 + $0x38] sm:$0xf]
    %v275 = vld [vmem:[#allocation8 + $0x3c] sm:$0xf]
    %v276 = vld [vmem:[%s6] sm:$0x1]
    %v278 = vperm.slane %v276, 0
    %v296 = vunpack.c.l.b16 %v260
    %v297 = vunpack.c.l.b16 %v261
    %v298 = vunpack.c.l.b16 %v262
    %v299 = vunpack.c.l.b16 %v263
    %v300 = vunpack.c.l.b16 %v264
    %v301 = vunpack.c.l.b16 %v265
    %v302 = vunpack.c.l.b16 %v266
    %v303 = vunpack.c.l.b16 %v267
    %v304 = vunpack.c.l.b16 %v268
    %v305 = vunpack.c.l.b16 %v269
    %v306 = vunpack.c.l.b16 %v270
    %v307 = vunpack.c.l.b16 %v271
    %v308 = vunpack.c.l.b16 %v272
    %v309 = vunpack.c.l.b16 %v273
    %v310 = vunpack.c.l.b16 %v274
    %v311 = vunpack.c.l.b16 %v275
    %v312 = vpack.c.b16 %v297, %v296
    %v313 = vpack.c.b16 %v299, %v298
    %v314 = vpack.c.b16 %v301, %v300
    %v315 = vpack.c.b16 %v303, %v302
    %v316 = vpack.c.b16 %v305, %v304
    %v317 = vpack.c.b16 %v307, %v306
    %v318 = vpack.c.b16 %v309, %v308
    %v319 = vpack.c.b16 %v311, %v310
    %328 = vmatpush.bf16.msra.mxu0 %v319
    %329 = vmatpush.bf16.msra.mxu0 %v318
    %330 = vmatpush.bf16.msra.mxu0 %v317
    %331 = vmatpush.bf16.msra.mxu0 %v316
    %332 = vmatpush.bf16.msra.mxu0 %v315
    %333 = vmatpush.bf16.msra.mxu0 %v314
    %334 = vmatpush.bf16.msra.mxu0 %v313
    %335 = vmatpush.bf16.msra.mxu0 %v312
    %336 = vmatmul.bf16.gmra.mxu0 %v259
    %v337 = vpop.f32.mrf.mxu0
    %v338 = vadd.f32 %v278, %v337
    %v339 = vpop.f32.mrf.mxu0
    %340 = vdwg.mxu0
    %341 = vst [vmem:[#allocation10] sm:$0xff] %v338
    // Predicated region
    $region46: #{tpu_custom_call.1} parent=1 // pred_check
      _
    $region47: #{tpu_custom_call.1} parent=1 // pred_check_branch
      %343 = sbr.rel (0) target = $region49
    $region48: #{tpu_custom_call.1} parent=1 // pred_region
      %345 = vsyncadd [#allocation4], 0
      %s347 = sshll.u32 [#allocation10], 4
      %s348 = int_to_ptr.vmem [resolvable:$true] %s347
      %s349 = sshll.u32 %s7, 4
      %s350 = int_to_ptr.hbm [resolvable:$true] %s349
      %352 = dma.vmem_to_hbm [thread:$0]  %s348, 128, %s350, [#allocation4]
    $region49: #{tpu_custom_call.1} parent=1 // pred_fallthru
      _
    // Predicated region
    $region50: #{tpu_custom_call.1} parent=1 // pred_check
      _
    $region51: #{tpu_custom_call.1} parent=1 // pred_check_branch
      %354 = sbr.rel (0) target = $region53
    $region52: #{tpu_custom_call.1} parent=1 // pred_region
      %356 = dma.done [#allocation4], 128
    $region53: #{tpu_custom_call.1} parent=1 // pred_fallthru
      _
    %357 = vsyncpa [#allocation3], 1
    %358 = vsyncpa [#allocation6], 1
    %359 = vsyncpa [#allocation9], 1
    %360 = vsyncpa [#allocation4], 1

</llo_original>
